<compile_context>
chip_gen: v7x
topology: tpu7x:2x2x1
jax: 0.10.0
libtpu: 0.0.40
codegen_flags: <defaults>
</compile_context>

<pallas_src>
import functools

import jax
import jax.numpy as jnp
from jax.experimental import pallas as pl
from jax.experimental.pallas import tpu as pltpu


def _round_up(x, m):
    return (x + m - 1) // m * m


def _rbm_kernel(v_ref, w_ref, wt_ref, vb_ref, hb_ref, rh_ref, rv_ref,
                v_out_ref, *, k):
    # v_ref  : (TB, NV)  f32      visible tile
    # w_ref  : (NH, NV)  bf16     W        (for h_to_v:  h @ W)
    # wt_ref : (NV, NH)  bf16     W^T      (for v_to_h:  v @ W^T)
    # vb_ref : (1, NV)   f32      visible bias
    # hb_ref : (1, NH)   f32      hidden bias
    # rh_ref : (k, TB, NH) f32    uniforms for the k hidden samplings
    # rv_ref : (k, TB, NV) f32    uniforms for the k visible samplings
    TB, NV = v_ref.shape
    NH = wt_ref.shape[1]

    W = w_ref[...]                                   # bf16 (NH, NV)
    WT = wt_ref[...]                                 # bf16 (NV, NH)
    # Hoisted bias broadcasts (JAX does not CSE broadcast_in_dim in the loop).
    hb = jnp.broadcast_to(hb_ref[...], (TB, NH))
    vb = jnp.broadcast_to(vb_ref[...], (TB, NV))

    def v_to_h(vv, u):
        logits = jnp.dot(vv.astype(jnp.bfloat16), WT,
                         preferred_element_type=jnp.float32) + hb
        p = jax.nn.sigmoid(logits)
        # relu(sign(p - U)) == 1.0 where p > U else 0.0
        return (p > u).astype(jnp.float32)

    def h_to_v(hh, u):
        logits = jnp.dot(hh.astype(jnp.bfloat16), W,
                         preferred_element_type=jnp.float32) + vb
        p = jax.nn.sigmoid(logits)
        return (p > u).astype(jnp.float32)

    v0 = v_ref[...].astype(jnp.float32)
    h = v_to_h(v0, rh_ref[0])
    v_ = v0
    for i in range(k):                 # k is a small static int -> unrolled
        v_ = h_to_v(h, rv_ref[i])
        if i < k - 1:                  # final v_to_h is dead for the output
            h = v_to_h(v_, rh_ref[i + 1])

    v_out_ref[...] = v_.astype(v_out_ref.dtype)


def rbm_forward(v, W, v_bias, h_bias, key, *, k, tile_b=256):
    """Returns (v, v_) like RBM.forward. Requires k >= 1 (as in PyTorch)."""
    assert k >= 1
    B, n_vis = v.shape
    n_hin = W.shape[0]

    # Lane/sublane-aligned padded sizes.
    NV = _round_up(n_vis, 128)
    NH = _round_up(n_hin, 128)
    Bp = _round_up(B, 8)
    TB = min(tile_b, Bp)
    Bp = _round_up(Bp, TB)
    grid_b = Bp // TB

    # Zero-padding keeps padded lanes inert (zero W rows/cols, zero biases).
    v_p = jnp.pad(v.astype(jnp.float32), ((0, Bp - B), (0, NV - n_vis)))
    W_p = jnp.pad(W.astype(jnp.float32), ((0, NH - n_hin), (0, NV - n_vis)))
    W_bf = W_p.astype(jnp.bfloat16)
    WT_bf = W_p.T.astype(jnp.bfloat16)            # one-time transpose
    vb_p = jnp.pad(v_bias.astype(jnp.float32), (0, NV - n_vis)).reshape(1, NV)
    hb_p = jnp.pad(h_bias.astype(jnp.float32), (0, NH - n_hin)).reshape(1, NH)

    # Pre-drawn uniforms (one slab per sampling step), tiled over the batch.
    kh, kv = jax.random.split(key)
    rand_h = jax.random.uniform(kh, (k, Bp, NH), dtype=jnp.float32)
    rand_v = jax.random.uniform(kv, (k, Bp, NV), dtype=jnp.float32)

    kernel = functools.partial(_rbm_kernel, k=k)
    out = pl.pallas_call(
        kernel,
        out_shape=jax.ShapeDtypeStruct((Bp, NV), jnp.float32),
        grid=(grid_b,),
        in_specs=[
            pl.BlockSpec((TB, NV), lambda i: (i, 0)),        # v tile
            pl.BlockSpec((NH, NV), lambda i: (0, 0)),        # W (resident)
            pl.BlockSpec((NV, NH), lambda i: (0, 0)),        # W^T (resident)
            pl.BlockSpec((1, NV), lambda i: (0, 0)),         # v_bias
            pl.BlockSpec((1, NH), lambda i: (0, 0)),         # h_bias
            pl.BlockSpec((k, TB, NH), lambda i: (0, i, 0)),  # hidden uniforms
            pl.BlockSpec((k, TB, NV), lambda i: (0, i, 0)),  # visible uniforms
        ],
        out_specs=pl.BlockSpec((TB, NV), lambda i: (i, 0)),
        compiler_params=pltpu.CompilerParams(
            dimension_semantics=("parallel",),
            vmem_limit_bytes=64 * 1024 * 1024,
        ),
    )(v_p, W_bf, WT_bf, vb_p, hb_p, rand_h, rand_v)

    return v, out[:B, :n_vis]


if __name__ == "__main__":
    # Small shapes consistent with the module (real sizes: n_vis=784, n_hin=500,
    # k=5).  Deliberately non-128-aligned to exercise the padding path.
    B, N_VIS, N_HIN, K = 8, 200, 120, 3

    key = jax.random.PRNGKey(0)
    k_w, k_v, k_u = jax.random.split(key, 3)

    # Parameter init mirroring __init__: W ~ 0.01*N(0,1), zero biases.
    W = 0.01 * jax.random.normal(k_w, (N_HIN, N_VIS), dtype=jnp.float32)
    v_bias = jnp.zeros((N_VIS,), dtype=jnp.float32)
    h_bias = jnp.zeros((N_HIN,), dtype=jnp.float32)

    # Example visible units (binary, like the binarized MNIST the script uses).
    v_in = (jax.random.uniform(k_v, (B, N_VIS)) > 0.5).astype(jnp.float32)

    v_orig, v_recon = rbm_forward(v_in, W, v_bias, h_bias, k_u, k=K)
    jax.block_until_ready(v_recon)

    assert v_orig.shape == (B, N_VIS) and v_recon.shape == (B, N_VIS)
    assert v_recon.dtype == jnp.float32
    # Samples are exactly {0, 1}.
    assert bool(jnp.all((v_recon == 0.0) | (v_recon == 1.0)))
    # Returned v is the untouched input.
    assert bool(jnp.all(v_orig == v_in))

    print("KERNEL_OK")
</pallas_src>

<mosaic_0001>
module attributes {stable_mosaic.version = 11 : i64} {
  func.func @_rbm_kernel(%arg0: i32, %arg1: memref<8x256xf32, #tpu.memory_space<vmem>>, %arg2: memref<128x256xbf16, #tpu.memory_space<vmem>>, %arg3: memref<256x128xbf16, #tpu.memory_space<vmem>>, %arg4: memref<1x256xf32, #tpu.memory_space<vmem>>, %arg5: memref<1x128xf32, #tpu.memory_space<vmem>>, %arg6: memref<3x8x128xf32, #tpu.memory_space<vmem>>, %arg7: memref<3x8x256xf32, #tpu.memory_space<vmem>>, %arg8: memref<8x256xf32, #tpu.memory_space<vmem>>) attributes {dimension_semantics = [#tpu.dimension_semantics<parallel>], iteration_bounds = array<i64: 1>, scalar_prefetch = 0 : i64, scratch_operands = 0 : i64, tpu.core_type = #tpu.core_type<tc>, window_params = [{transform_indices = @transform_0, window_bounds = array<i64: 8, 256>}, {pipeline_mode = #tpu.pipeline_mode<synchronous>, transform_indices = @transform_1, window_bounds = array<i64: 128, 256>}, {pipeline_mode = #tpu.pipeline_mode<synchronous>, transform_indices = @transform_2, window_bounds = array<i64: 256, 128>}, {pipeline_mode = #tpu.pipeline_mode<synchronous>, transform_indices = @transform_3, window_bounds = array<i64: 1, 256>}, {pipeline_mode = #tpu.pipeline_mode<synchronous>, transform_indices = @transform_4, window_bounds = array<i64: 1, 128>}, {transform_indices = @transform_5, window_bounds = array<i64: 3, 8, 128>}, {transform_indices = @transform_6, window_bounds = array<i64: 3, 8, 256>}, {transform_indices = @transform_7, window_bounds = array<i64: 8, 256>}]} {
    %c0 = arith.constant 0 : index
    %c0_0 = arith.constant 0 : index
    %0 = vector.load %arg2[%c0, %c0_0] : memref<128x256xbf16, #tpu.memory_space<vmem>>, vector<128x256xbf16>
    %c0_1 = arith.constant 0 : index
    %c0_2 = arith.constant 0 : index
    %1 = vector.load %arg3[%c0_1, %c0_2] : memref<256x128xbf16, #tpu.memory_space<vmem>>, vector<256x128xbf16>
    %c0_3 = arith.constant 0 : index
    %c0_4 = arith.constant 0 : index
    %2 = vector.load %arg5[%c0_3, %c0_4] : memref<1x128xf32, #tpu.memory_space<vmem>>, vector<1x128xf32>
    %3 = vector.shape_cast %2 : vector<1x128xf32> to vector<1x128xf32>
    %4 = vector.broadcast %3 : vector<1x128xf32> to vector<8x128xf32>
    %c0_5 = arith.constant 0 : index
    %c0_6 = arith.constant 0 : index
    %5 = vector.load %arg4[%c0_5, %c0_6] : memref<1x256xf32, #tpu.memory_space<vmem>>, vector<1x256xf32>
    %6 = vector.shape_cast %5 : vector<1x256xf32> to vector<1x256xf32>
    %7 = vector.broadcast %6 : vector<1x256xf32> to vector<8x256xf32>
    %c0_7 = arith.constant 0 : index
    %c0_8 = arith.constant 0 : index
    %8 = vector.load %arg1[%c0_7, %c0_8] : memref<8x256xf32, #tpu.memory_space<vmem>>, vector<8x256xf32>
    %c0_9 = arith.constant 0 : index
    %c0_10 = arith.constant 0 : index
    %c0_11 = arith.constant 0 : index
    %9 = vector.load %arg6[%c0_9, %c0_10, %c0_11] : memref<3x8x128xf32, #tpu.memory_space<vmem>>, vector<1x8x128xf32>
    %10 = vector.shape_cast %9 : vector<1x8x128xf32> to vector<8x128xf32>
    %11 = arith.truncf %8 : vector<8x256xf32> to vector<8x256xbf16>
    %cst = arith.constant dense<0.000000e+00> : vector<8x128xf32>
    %12 = tpu.matmul %11, %1, %cst {dimension_numbers = #tpu.dot_dimension_numbers<[1], [0], [0], [1], [0, 0, 1, 1], [], []>} : vector<8x256xbf16>, vector<256x128xbf16>, vector<8x128xf32> -> vector<8x128xf32>
    %13 = arith.addf %12, %4 : vector<8x128xf32>
    %14 = arith.negf %13 : vector<8x128xf32>
    %15 = math.exp %14 : vector<8x128xf32>
    %cst_12 = arith.constant 1.000000e+00 : f32
    %16 = vector.broadcast %cst_12 : f32 to vector<8x128xf32>
    %17 = arith.addf %16, %15 : vector<8x128xf32>
    %18 = arith.divf %16, %17 : vector<8x128xf32>
    %19 = arith.cmpf ogt, %18, %10 : vector<8x128xf32>
    %20 = arith.extui %19 : vector<8x128xi1> to vector<8x128xi32>
    %21 = arith.sitofp %20 : vector<8x128xi32> to vector<8x128xf32>
    %c0_13 = arith.constant 0 : index
    %c0_14 = arith.constant 0 : index
    %c0_15 = arith.constant 0 : index
    %22 = vector.load %arg7[%c0_13, %c0_14, %c0_15] : memref<3x8x256xf32, #tpu.memory_space<vmem>>, vector<1x8x256xf32>
    %23 = vector.shape_cast %22 : vector<1x8x256xf32> to vector<8x256xf32>
    %24 = arith.truncf %21 : vector<8x128xf32> to vector<8x128xbf16>
    %cst_16 = arith.constant dense<0.000000e+00> : vector<8x256xf32>
    %25 = tpu.matmul %24, %0, %cst_16 {dimension_numbers = #tpu.dot_dimension_numbers<[1], [0], [0], [1], [0, 0, 1, 1], [], []>} : vector<8x128xbf16>, vector<128x256xbf16>, vector<8x256xf32> -> vector<8x256xf32>
    %26 = arith.addf %25, %7 : vector<8x256xf32>
    %27 = arith.negf %26 : vector<8x256xf32>
    %28 = math.exp %27 : vector<8x256xf32>
    %cst_17 = arith.constant 1.000000e+00 : f32
    %29 = vector.broadcast %cst_17 : f32 to vector<8x256xf32>
    %30 = arith.addf %29, %28 : vector<8x256xf32>
    %31 = arith.divf %29, %30 : vector<8x256xf32>
    %32 = arith.cmpf ogt, %31, %23 : vector<8x256xf32>
    %33 = arith.extui %32 : vector<8x256xi1> to vector<8x256xi32>
    %34 = arith.sitofp %33 : vector<8x256xi32> to vector<8x256xf32>
    %c1 = arith.constant 1 : index
    %c0_18 = arith.constant 0 : index
    %c0_19 = arith.constant 0 : index
    %35 = vector.load %arg6[%c1, %c0_18, %c0_19] : memref<3x8x128xf32, #tpu.memory_space<vmem>>, vector<1x8x128xf32>
    %36 = vector.shape_cast %35 : vector<1x8x128xf32> to vector<8x128xf32>
    %37 = arith.truncf %34 : vector<8x256xf32> to vector<8x256xbf16>
    %cst_20 = arith.constant dense<0.000000e+00> : vector<8x128xf32>
    %38 = tpu.matmul %37, %1, %cst_20 {dimension_numbers = #tpu.dot_dimension_numbers<[1], [0], [0], [1], [0, 0, 1, 1], [], []>} : vector<8x256xbf16>, vector<256x128xbf16>, vector<8x128xf32> -> vector<8x128xf32>
    %39 = arith.addf %38, %4 : vector<8x128xf32>
    %40 = arith.negf %39 : vector<8x128xf32>
    %41 = math.exp %40 : vector<8x128xf32>
    %cst_21 = arith.constant 1.000000e+00 : f32
    %42 = vector.broadcast %cst_21 : f32 to vector<8x128xf32>
    %43 = arith.addf %42, %41 : vector<8x128xf32>
    %44 = arith.divf %42, %43 : vector<8x128xf32>
    %45 = arith.cmpf ogt, %44, %36 : vector<8x128xf32>
    %46 = arith.extui %45 : vector<8x128xi1> to vector<8x128xi32>
    %47 = arith.sitofp %46 : vector<8x128xi32> to vector<8x128xf32>
    %c1_22 = arith.constant 1 : index
    %c0_23 = arith.constant 0 : index
    %c0_24 = arith.constant 0 : index
    %48 = vector.load %arg7[%c1_22, %c0_23, %c0_24] : memref<3x8x256xf32, #tpu.memory_space<vmem>>, vector<1x8x256xf32>
    %49 = vector.shape_cast %48 : vector<1x8x256xf32> to vector<8x256xf32>
    %50 = arith.truncf %47 : vector<8x128xf32> to vector<8x128xbf16>
    %cst_25 = arith.constant dense<0.000000e+00> : vector<8x256xf32>
    %51 = tpu.matmul %50, %0, %cst_25 {dimension_numbers = #tpu.dot_dimension_numbers<[1], [0], [0], [1], [0, 0, 1, 1], [], []>} : vector<8x128xbf16>, vector<128x256xbf16>, vector<8x256xf32> -> vector<8x256xf32>
    %52 = arith.addf %51, %7 : vector<8x256xf32>
    %53 = arith.negf %52 : vector<8x256xf32>
    %54 = math.exp %53 : vector<8x256xf32>
    %cst_26 = arith.constant 1.000000e+00 : f32
    %55 = vector.broadcast %cst_26 : f32 to vector<8x256xf32>
    %56 = arith.addf %55, %54 : vector<8x256xf32>
    %57 = arith.divf %55, %56 : vector<8x256xf32>
    %58 = arith.cmpf ogt, %57, %49 : vector<8x256xf32>
    %59 = arith.extui %58 : vector<8x256xi1> to vector<8x256xi32>
    %60 = arith.sitofp %59 : vector<8x256xi32> to vector<8x256xf32>
    %c2 = arith.constant 2 : index
    %c0_27 = arith.constant 0 : index
    %c0_28 = arith.constant 0 : index
    %61 = vector.load %arg6[%c2, %c0_27, %c0_28] : memref<3x8x128xf32, #tpu.memory_space<vmem>>, vector<1x8x128xf32>
    %62 = vector.shape_cast %61 : vector<1x8x128xf32> to vector<8x128xf32>
    %63 = arith.truncf %60 : vector<8x256xf32> to vector<8x256xbf16>
    %cst_29 = arith.constant dense<0.000000e+00> : vector<8x128xf32>
    %64 = tpu.matmul %63, %1, %cst_29 {dimension_numbers = #tpu.dot_dimension_numbers<[1], [0], [0], [1], [0, 0, 1, 1], [], []>} : vector<8x256xbf16>, vector<256x128xbf16>, vector<8x128xf32> -> vector<8x128xf32>
    %65 = arith.addf %64, %4 : vector<8x128xf32>
    %66 = arith.negf %65 : vector<8x128xf32>
    %67 = math.exp %66 : vector<8x128xf32>
    %cst_30 = arith.constant 1.000000e+00 : f32
    %68 = vector.broadcast %cst_30 : f32 to vector<8x128xf32>
    %69 = arith.addf %68, %67 : vector<8x128xf32>
    %70 = arith.divf %68, %69 : vector<8x128xf32>
    %71 = arith.cmpf ogt, %70, %62 : vector<8x128xf32>
    %72 = arith.extui %71 : vector<8x128xi1> to vector<8x128xi32>
    %73 = arith.sitofp %72 : vector<8x128xi32> to vector<8x128xf32>
    %c2_31 = arith.constant 2 : index
    %c0_32 = arith.constant 0 : index
    %c0_33 = arith.constant 0 : index
    %74 = vector.load %arg7[%c2_31, %c0_32, %c0_33] : memref<3x8x256xf32, #tpu.memory_space<vmem>>, vector<1x8x256xf32>
    %75 = vector.shape_cast %74 : vector<1x8x256xf32> to vector<8x256xf32>
    %76 = arith.truncf %73 : vector<8x128xf32> to vector<8x128xbf16>
    %cst_34 = arith.constant dense<0.000000e+00> : vector<8x256xf32>
    %77 = tpu.matmul %76, %0, %cst_34 {dimension_numbers = #tpu.dot_dimension_numbers<[1], [0], [0], [1], [0, 0, 1, 1], [], []>} : vector<8x128xbf16>, vector<128x256xbf16>, vector<8x256xf32> -> vector<8x256xf32>
    %78 = arith.addf %77, %7 : vector<8x256xf32>
    %79 = arith.negf %78 : vector<8x256xf32>
    %80 = math.exp %79 : vector<8x256xf32>
    %cst_35 = arith.constant 1.000000e+00 : f32
    %81 = vector.broadcast %cst_35 : f32 to vector<8x256xf32>
    %82 = arith.addf %81, %80 : vector<8x256xf32>
    %83 = arith.divf %81, %82 : vector<8x256xf32>
    %84 = arith.cmpf ogt, %83, %75 : vector<8x256xf32>
    %85 = arith.extui %84 : vector<8x256xi1> to vector<8x256xi32>
    %86 = arith.sitofp %85 : vector<8x256xi32> to vector<8x256xf32>
    %c0_36 = arith.constant 0 : index
    %c0_37 = arith.constant 0 : index
    %87 = vector.load %arg8[%c0_36, %c0_37] : memref<8x256xf32, #tpu.memory_space<vmem>>, vector<8x256xf32>
    tpu.vector_store %arg8[%c0_36, %c0_37], %86 {strides = array<i32>} : memref<8x256xf32, #tpu.memory_space<vmem>>, vector<8x256xf32>,
    return
  }
  func.func @transform_0(%arg0: i32) -> (i32, i32) {
    %c0_i32 = arith.constant 0 : i32
    %c0_i32_0 = arith.constant 0 : i32
    return %arg0, %c0_i32 : i32, i32
  }
  func.func @transform_1(%arg0: i32) -> (i32, i32) {
    %c0_i32 = arith.constant 0 : i32
    %c0_i32_0 = arith.constant 0 : i32
    %c0_i32_1 = arith.constant 0 : i32
    return %c0_i32, %c0_i32_0 : i32, i32
  }
  func.func @transform_2(%arg0: i32) -> (i32, i32) {
    %c0_i32 = arith.constant 0 : i32
    %c0_i32_0 = arith.constant 0 : i32
    %c0_i32_1 = arith.constant 0 : i32
    return %c0_i32, %c0_i32_0 : i32, i32
  }
  func.func @transform_3(%arg0: i32) -> (i32, i32) {
    %c0_i32 = arith.constant 0 : i32
    %c0_i32_0 = arith.constant 0 : i32
    %c0_i32_1 = arith.constant 0 : i32
    return %c0_i32, %c0_i32_0 : i32, i32
  }
  func.func @transform_4(%arg0: i32) -> (i32, i32) {
    %c0_i32 = arith.constant 0 : i32
    %c0_i32_0 = arith.constant 0 : i32
    %c0_i32_1 = arith.constant 0 : i32
    return %c0_i32, %c0_i32_0 : i32, i32
  }
  func.func @transform_5(%arg0: i32) -> (i32, i32, i32) {
    %c0_i32 = arith.constant 0 : i32
    %c0_i32_0 = arith.constant 0 : i32
    %c0_i32_1 = arith.constant 0 : i32
    return %c0_i32, %arg0, %c0_i32_0 : i32, i32, i32
  }
  func.func @transform_6(%arg0: i32) -> (i32, i32, i32) {
    %c0_i32 = arith.constant 0 : i32
    %c0_i32_0 = arith.constant 0 : i32
    %c0_i32_1 = arith.constant 0 : i32
    return %c0_i32, %arg0, %c0_i32_0 : i32, i32, i32
  }
  func.func @transform_7(%arg0: i32) -> (i32, i32) {
    %c0_i32 = arith.constant 0 : i32
    %c0_i32_0 = arith.constant 0 : i32
    return %arg0, %c0_i32 : i32, i32
  }
}

</mosaic_0001>

<llo_original>
// kernel: tpu_custom_call.1
$region0: #{tpu_custom_call.1}
  #allocation0 [shape = 'u32[]', space=smem, size = 0x4, offset = 0x4, fixed_abs, tag = 'smem constant byte address 0x4 - core index']
  #allocation1 [shape = 'u32[144,128]{1,0:T(1,128)}', space=vmem, size = 0x12000, scoped, tag = 'internal scratch']
  %s0 = inlined_call_operand.hbm [shape: f32[8,256], index: 0, kind: input, shape index: {}]
  %s1 = inlined_call_operand.hbm [shape: bf16[128,256], index: 1, kind: input, shape index: {}]
  %s2 = inlined_call_operand.hbm [shape: bf16[256,128], index: 2, kind: input, shape index: {}]
  %s3 = inlined_call_operand.hbm [shape: f32[1,256], index: 3, kind: input, shape index: {}]
  %s4 = inlined_call_operand.hbm [shape: f32[1,128], index: 4, kind: input, shape index: {}]
  %s5 = inlined_call_operand.hbm [shape: f32[3,8,128], index: 5, kind: input, shape index: {}]
  %s6 = inlined_call_operand.hbm [shape: f32[3,8,256], index: 6, kind: input, shape index: {}]
  %s7 = inlined_call_operand.hbm [shape: f32[8,256], index: 7, kind: output, shape index: {}]
  %s8 = sld [smem:[#allocation0]]
  $region66: #{tpu_custom_call.1} parent=0
    _
  %s10 = ssub.s32 1, %s8
  %s11 = scalar_select 0, %s10, %s8
  $region1: #{tpu_custom_call.1} parent=0
    #allocation2 [shape = 'u8[8192]{0}', space=vmem, size = 0x2000, scoped, tag = 'input window, operand 0, single buffered']
    #allocation3 [shape = 's32[1]{0}', space=sflag, size = 0x4, scoped, tag = 'scoped memory for tpu_custom_call.1']
    #allocation4 [shape = 's32[1]{0}', space=sflag, size = 0x4, scoped, tag = 'scoped memory for tpu_custom_call.1']
    #allocation5 [shape = 'u8[65536]{0}', space=vmem, size = 0x10000, scoped, tag = 'input window, operand 1, single buffered']
    #allocation6 [shape = 's32[1]{0}', space=sflag, size = 0x4, scoped, tag = 'scoped memory for tpu_custom_call.1']
    #allocation7 [shape = 'u8[65536]{0}', space=vmem, size = 0x10000, scoped, tag = 'input window, operand 2, single buffered']
    #allocation8 [shape = 'u8[1024]{0}', space=vmem, size = 0x400, scoped, tag = 'input window, operand 3, single buffered']
    #allocation9 [shape = 's32[1]{0}', space=sflag, size = 0x4, scoped, tag = 'scoped memory for tpu_custom_call.1']
    #allocation10 [shape = 'u8[512]{0}', space=vmem, size = 0x400, scoped, tag = 'input window, operand 4, single buffered']
    #allocation11 [shape = 'u8[12288]{0}', space=vmem, size = 0x3000, scoped, tag = 'input window, operand 5, single buffered']
    #allocation12 [shape = 's32[1]{0}', space=sflag, size = 0x4, scoped, tag = 'scoped memory for tpu_custom_call.1']
    #allocation13 [shape = 'u8[24576]{0}', space=vmem, size = 0x6000, scoped, tag = 'input window, operand 6, single buffered']
    #allocation14 [shape = 'u8[8192]{0}', space=vmem, size = 0x2000, scoped, tag = 'output window, operand 0, single buffered']
    %12 = vsyncpa [#allocation3], 0
    %13 = vsyncpa [#allocation6], 0
    %14 = vsyncpa [#allocation9], 0
    %15 = vsyncpa [#allocation12], 0
    %16 = vsyncpa [#allocation4], 0
    // Predicated region
    $region2: #{tpu_custom_call.1} parent=1 // pred_check
      _
    $region3: #{tpu_custom_call.1} parent=1 // pred_check_branch
      %18 = sbr.rel (0) target = $region5
    $region4: #{tpu_custom_call.1} parent=1 // pred_region
      %s20 = ssub.s32 256, 256
      %21 = vsyncadd [#allocation3], %s20
      %s23 = sshll.u32 [#allocation2], 4
      %s24 = int_to_ptr.vmem [resolvable:$true] %s23
      %26 = dma.hbm_to_vmem [thread:$0]  %s0, 256, %s24, [#allocation3]
    $region5: #{tpu_custom_call.1} parent=1 // pred_fallthru
      _
    // Predicated region
    $region6: #{tpu_custom_call.1} parent=1 // pred_check
      _
    $region7: #{tpu_custom_call.1} parent=1 // pred_check_branch
      %28 = sbr.rel (0) target = $region9
    $region8: #{tpu_custom_call.1} parent=1 // pred_region
      %s30 = ssub.s32 2048, 2048
      %31 = vsyncadd [#allocation6], %s30
      %s32 = sshll.u32 [#allocation5], 4
      %s33 = int_to_ptr.vmem [resolvable:$true] %s32
      %38 = dma.hbm_to_vmem [thread:$0]  %s1, 2048, %s33, [#allocation6], 128, 128, 8
    $region9: #{tpu_custom_call.1} parent=1 // pred_fallthru
      _
    // Predicated region
    $region10: #{tpu_custom_call.1} parent=1 // pred_check
      _
    $region11: #{tpu_custom_call.1} parent=1 // pred_check_branch
      %40 = sbr.rel (0) target = $region13
    $region12: #{tpu_custom_call.1} parent=1 // pred_region
      %s42 = ssub.s32 2048, 2048
      %43 = vsyncadd [#allocation6], %s42
      %s44 = sshll.u32 [#allocation7], 4
      %s45 = int_to_ptr.vmem [resolvable:$true] %s44
      %50 = dma.hbm_to_vmem [thread:$0]  %s2, 2048, %s45, [#allocation6], 64, 64, 4
    $region13: #{tpu_custom_call.1} parent=1 // pred_fallthru
      _
    // Predicated region
    $region14: #{tpu_custom_call.1} parent=1 // pred_check
      _
    $region15: #{tpu_custom_call.1} parent=1 // pred_check_branch
      %52 = sbr.rel (0) target = $region17
    $region16: #{tpu_custom_call.1} parent=1 // pred_region
      %s54 = ssub.s32 32, 32
      %55 = vsyncadd [#allocation9], %s54
      %s57 = sshll.u32 [#allocation8], 4
      %s58 = int_to_ptr.vmem [resolvable:$true] %s57
      %60 = dma.hbm_to_vmem [thread:$0]  %s3, 32, %s58, [#allocation9]
    $region17: #{tpu_custom_call.1} parent=1 // pred_fallthru
      _
    // Predicated region
    $region18: #{tpu_custom_call.1} parent=1 // pred_check
      _
    $region19: #{tpu_custom_call.1} parent=1 // pred_check_branch
      %62 = sbr.rel (0) target = $region21
    $region20: #{tpu_custom_call.1} parent=1 // pred_region
      %s64 = ssub.s32 16, 16
      %65 = vsyncadd [#allocation9], %s64
      %s67 = sshll.u32 [#allocation10], 4
      %s68 = int_to_ptr.vmem [resolvable:$true] %s67
      %70 = dma.hbm_to_vmem [thread:$0]  %s4, 16, %s68, [#allocation9]
    $region21: #{tpu_custom_call.1} parent=1 // pred_fallthru
      _
    // Predicated region
    $region22: #{tpu_custom_call.1} parent=1 // pred_check
      _
    $region23: #{tpu_custom_call.1} parent=1 // pred_check_branch
      %72 = sbr.rel (0) target = $region25
    $region24: #{tpu_custom_call.1} parent=1 // pred_region
      %s74 = ssub.s32 384, 384
      %75 = vsyncadd [#allocation12], %s74
      %s76 = sshll.u32 [#allocation11], 4
      %s77 = int_to_ptr.vmem [resolvable:$true] %s76
      %82 = dma.hbm_to_vmem [thread:$0]  %s5, 384, %s77, [#allocation12], 128, 128, 8
    $region25: #{tpu_custom_call.1} parent=1 // pred_fallthru
      _
    // Predicated region
    $region26: #{tpu_custom_call.1} parent=1 // pred_check
      _
    $region27: #{tpu_custom_call.1} parent=1 // pred_check_branch
      %84 = sbr.rel (0) target = $region29
    $region28: #{tpu_custom_call.1} parent=1 // pred_region
      %s86 = ssub.s32 768, 768
      %87 = vsyncadd [#allocation12], %s86
      %s88 = sshll.u32 [#allocation13], 4
      %s89 = int_to_ptr.vmem [resolvable:$true] %s88
      %94 = dma.hbm_to_vmem [thread:$0]  %s6, 768, %s89, [#allocation12], 256, 256, 16
    $region29: #{tpu_custom_call.1} parent=1 // pred_fallthru
      _
    // Predicated region
    $region30: #{tpu_custom_call.1} parent=1 // pred_check
      _
    $region31: #{tpu_custom_call.1} parent=1 // pred_check_branch
      %96 = sbr.rel (0) target = $region33
    $region32: #{tpu_custom_call.1} parent=1 // pred_region
      %97 = dma.done [#allocation3], 256
    $region33: #{tpu_custom_call.1} parent=1 // pred_fallthru
      _
    // Predicated region
    $region34: #{tpu_custom_call.1} parent=1 // pred_check
      _
    $region35: #{tpu_custom_call.1} parent=1 // pred_check_branch
      %99 = sbr.rel (0) target = $region37
    $region36: #{tpu_custom_call.1} parent=1 // pred_region
      %100 = dma.done [#allocation6], 2048
    $region37: #{tpu_custom_call.1} parent=1 // pred_fallthru
      _
    // Predicated region
    $region38: #{tpu_custom_call.1} parent=1 // pred_check
      _
    $region39: #{tpu_custom_call.1} parent=1 // pred_check_branch
      %102 = sbr.rel (0) target = $region41
    $region40: #{tpu_custom_call.1} parent=1 // pred_region
      %103 = dma.done [#allocation6], 2048
    $region41: #{tpu_custom_call.1} parent=1 // pred_fallthru
      _
    // Predicated region
    $region42: #{tpu_custom_call.1} parent=1 // pred_check
      _
    $region43: #{tpu_custom_call.1} parent=1 // pred_check_branch
      %105 = sbr.rel (0) target = $region45
    $region44: #{tpu_custom_call.1} parent=1 // pred_region
      %106 = dma.done [#allocation9], 32
    $region45: #{tpu_custom_call.1} parent=1 // pred_fallthru
      _
    // Predicated region
    $region46: #{tpu_custom_call.1} parent=1 // pred_check
      _
    $region47: #{tpu_custom_call.1} parent=1 // pred_check_branch
      %108 = sbr.rel (0) target = $region49
    $region48: #{tpu_custom_call.1} parent=1 // pred_region
      %109 = dma.done [#allocation9], 16
    $region49: #{tpu_custom_call.1} parent=1 // pred_fallthru
      _
    // Predicated region
    $region50: #{tpu_custom_call.1} parent=1 // pred_check
      _
    $region51: #{tpu_custom_call.1} parent=1 // pred_check_branch
      %111 = sbr.rel (0) target = $region53
    $region52: #{tpu_custom_call.1} parent=1 // pred_region
      %112 = dma.done [#allocation12], 384
    $region53: #{tpu_custom_call.1} parent=1 // pred_fallthru
      _
    // Predicated region
    $region54: #{tpu_custom_call.1} parent=1 // pred_check
      _
    $region55: #{tpu_custom_call.1} parent=1 // pred_check_branch
      %114 = sbr.rel (0) target = $region57
    $region56: #{tpu_custom_call.1} parent=1 // pred_region
      %115 = dma.done [#allocation12], 768
    $region57: #{tpu_custom_call.1} parent=1 // pred_fallthru
      _
    %v117 = vld [vmem:[#allocation5] sm:$0xff]
    %v118 = vld [vmem:[#allocation5 + $0x8] sm:$0xff]
    %v119 = vld [vmem:[#allocation5 + $0x10] sm:$0xff]
    %v120 = vld [vmem:[#allocation5 + $0x18] sm:$0xff]
    %v121 = vld [vmem:[#allocation5 + $0x20] sm:$0xff]
    %v122 = vld [vmem:[#allocation5 + $0x28] sm:$0xff]
    %v123 = vld [vmem:[#allocation5 + $0x30] sm:$0xff]
    %v124 = vld [vmem:[#allocation5 + $0x38] sm:$0xff]
    %v125 = vld [vmem:[#allocation5 + $0x40] sm:$0xff]
    %v126 = vld [vmem:[#allocation5 + $0x48] sm:$0xff]
    %v127 = vld [vmem:[#allocation5 + $0x50] sm:$0xff]
    %v128 = vld [vmem:[#allocation5 + $0x58] sm:$0xff]
    %v129 = vld [vmem:[#allocation5 + $0x60] sm:$0xff]
    %v130 = vld [vmem:[#allocation5 + $0x68] sm:$0xff]
    %v131 = vld [vmem:[#allocation5 + $0x70] sm:$0xff]
    %v132 = vld [vmem:[#allocation5 + $0x78] sm:$0xff]
    %v133 = vld [vmem:[#allocation7] sm:$0xf]
    %v134 = vld [vmem:[#allocation7 + $0x4] sm:$0xf]
    %v135 = vld [vmem:[#allocation7 + $0x8] sm:$0xf]
    %v136 = vld [vmem:[#allocation7 + $0xc] sm:$0xf]
    %v137 = vld [vmem:[#allocation7 + $0x10] sm:$0xf]
    %v138 = vld [vmem:[#allocation7 + $0x14] sm:$0xf]
    %v139 = vld [vmem:[#allocation7 + $0x18] sm:$0xf]
    %v140 = vld [vmem:[#allocation7 + $0x1c] sm:$0xf]
    %v141 = vld [vmem:[#allocation7 + $0x20] sm:$0xf]
    %v142 = vld [vmem:[#allocation7 + $0x24] sm:$0xf]
    %v143 = vld [vmem:[#allocation7 + $0x28] sm:$0xf]
    %v144 = vld [vmem:[#allocation7 + $0x2c] sm:$0xf]
    %v145 = vld [vmem:[#allocation7 + $0x30] sm:$0xf]
    %v146 = vld [vmem:[#allocation7 + $0x34] sm:$0xf]
    %v147 = vld [vmem:[#allocation7 + $0x38] sm:$0xf]
    %v148 = vld [vmem:[#allocation7 + $0x3c] sm:$0xf]
    %v149 = vld [vmem:[#allocation7 + $0x40] sm:$0xf]
    %v150 = vld [vmem:[#allocation7 + $0x44] sm:$0xf]
    %v151 = vld [vmem:[#allocation7 + $0x48] sm:$0xf]
    %v152 = vld [vmem:[#allocation7 + $0x4c] sm:$0xf]
    %v153 = vld [vmem:[#allocation7 + $0x50] sm:$0xf]
    %v154 = vld [vmem:[#allocation7 + $0x54] sm:$0xf]
    %v155 = vld [vmem:[#allocation7 + $0x58] sm:$0xf]
    %v156 = vld [vmem:[#allocation7 + $0x5c] sm:$0xf]
    %v157 = vld [vmem:[#allocation7 + $0x60] sm:$0xf]
    %v158 = vld [vmem:[#allocation7 + $0x64] sm:$0xf]
    %v159 = vld [vmem:[#allocation7 + $0x68] sm:$0xf]
    %v160 = vld [vmem:[#allocation7 + $0x6c] sm:$0xf]
    %v161 = vld [vmem:[#allocation7 + $0x70] sm:$0xf]
    %v162 = vld [vmem:[#allocation7 + $0x74] sm:$0xf]
    %v163 = vld [vmem:[#allocation7 + $0x78] sm:$0xf]
    %v164 = vld [vmem:[#allocation7 + $0x7c] sm:$0xf]
    %v165 = vld [vmem:[#allocation10] sm:$0x1]
    %v167 = vlaneseq
    %v168 = vshrl.u32 %v167, 7
    %v169 = vsub.s32 0, %v168
    %v170 = vrot.slane %v165, %v169
    %v172 = vld [vmem:[#allocation8] sm:$0x3]
    %v174 = vlaneseq
    %v175 = vshrl.u32 %v174, 7
    %v176 = vsub.s32 0, %v175
    %v177 = vrot.slane %v172, %v176
    %v178 = vlaneseq
    %v179 = vshrl.u32 %v178, 7
    %v180 = vsub.s32 1, %v179
    %v181 = vrot.slane %v172, %v180
    %v184 = vld [vmem:[#allocation2] sm:$0xff]
    %v185 = vld [vmem:[#allocation2 + $0x8] sm:$0xff]
    %v186 = vld [vmem:[#allocation11] sm:$0xff]
    %v187 = vpack.c.bf16 %v184, %v184
    %v188 = vpack.c.bf16 %v185, %v185
    %v221 = vunpack.c.l.b16 %v133
    %v222 = vunpack.c.l.b16 %v134
    %v223 = vunpack.c.l.b16 %v135
    %v224 = vunpack.c.l.b16 %v136
    %v225 = vunpack.c.l.b16 %v137
    %v226 = vunpack.c.l.b16 %v138
    %v227 = vunpack.c.l.b16 %v139
    %v228 = vunpack.c.l.b16 %v140
    %v229 = vunpack.c.l.b16 %v141
    %v230 = vunpack.c.l.b16 %v142
    %v231 = vunpack.c.l.b16 %v143
    %v232 = vunpack.c.l.b16 %v144
    %v233 = vunpack.c.l.b16 %v145
    %v234 = vunpack.c.l.b16 %v146
    %v235 = vunpack.c.l.b16 %v147
    %v236 = vunpack.c.l.b16 %v148
    %v237 = vunpack.c.l.b16 %v149
    %v238 = vunpack.c.l.b16 %v150
    %v239 = vunpack.c.l.b16 %v151
    %v240 = vunpack.c.l.b16 %v152
    %v241 = vunpack.c.l.b16 %v153
    %v242 = vunpack.c.l.b16 %v154
    %v243 = vunpack.c.l.b16 %v155
    %v244 = vunpack.c.l.b16 %v156
    %v245 = vunpack.c.l.b16 %v157
    %v246 = vunpack.c.l.b16 %v158
    %v247 = vunpack.c.l.b16 %v159
    %v248 = vunpack.c.l.b16 %v160
    %v249 = vunpack.c.l.b16 %v161
    %v250 = vunpack.c.l.b16 %v162
    %v251 = vunpack.c.l.b16 %v163
    %v252 = vunpack.c.l.b16 %v164
    %v253 = vpack.c.b16 %v222, %v221
    %v254 = vpack.c.b16 %v224, %v223
    %v255 = vpack.c.b16 %v226, %v225
    %v256 = vpack.c.b16 %v228, %v227
    %v257 = vpack.c.b16 %v230, %v229
    %v258 = vpack.c.b16 %v232, %v231
    %v259 = vpack.c.b16 %v234, %v233
    %v260 = vpack.c.b16 %v236, %v235
    %v261 = vpack.c.b16 %v238, %v237
    %v262 = vpack.c.b16 %v240, %v239
    %v263 = vpack.c.b16 %v242, %v241
    %v264 = vpack.c.b16 %v244, %v243
    %v265 = vpack.c.b16 %v246, %v245
    %v266 = vpack.c.b16 %v248, %v247
    %v267 = vpack.c.b16 %v250, %v249
    %v268 = vpack.c.b16 %v252, %v251
    %285 = vmatprep.subr.bf16.mxu0 0
    %286 = vmatpush1.bf16.msra.mxu0 %v253
    %287 = vmatprep.subr.bf16.mxu0 0
    %288 = vmatpush1.bf16.msra.mxu0 %v254
    %289 = vmatprep.subr.bf16.mxu0 0
    %290 = vmatpush1.bf16.msra.mxu0 %v255
    %291 = vmatprep.subr.bf16.mxu0 0
    %292 = vmatpush1.bf16.msra.mxu0 %v256
    %293 = vmatprep.subr.bf16.mxu0 0
    %294 = vmatpush1.bf16.msra.mxu0 %v257
    %295 = vmatprep.subr.bf16.mxu0 0
    %296 = vmatpush1.bf16.msra.mxu0 %v258
    %297 = vmatprep.subr.bf16.mxu0 0
    %298 = vmatpush1.bf16.msra.mxu0 %v259
    %299 = vmatprep.subr.bf16.mxu0 0
    %300 = vmatpush1.bf16.msra.mxu0 %v260
    %301 = vmatprep.subr.bf16.mxu0 0
    %302 = vmatpush1.bf16.msra.mxu0 %v261
    %303 = vmatprep.subr.bf16.mxu0 0
    %304 = vmatpush1.bf16.msra.mxu0 %v262
    %305 = vmatprep.subr.bf16.mxu0 0
    %306 = vmatpush1.bf16.msra.mxu0 %v263
    %307 = vmatprep.subr.bf16.mxu0 0
    %308 = vmatpush1.bf16.msra.mxu0 %v264
    %309 = vmatprep.subr.bf16.mxu0 0
    %310 = vmatpush1.bf16.msra.mxu0 %v265
    %311 = vmatprep.subr.bf16.mxu0 0
    %312 = vmatpush1.bf16.msra.mxu0 %v266
    %313 = vmatprep.subr.bf16.mxu0 0
    %314 = vmatpush1.bf16.msra.mxu0 %v267
    %315 = vmatprep.subr.bf16.mxu0 0
    %316 = vmatpush1.bf16.msra.mxu0 %v268
    %317 = vmatprep.mubr.bf16.mxu0 %v188
    %318 = vmatmul.mubr.bf16.gmra.mrb[0].mxu0 %v187
    %v319 = vpop.f32.mrb[0].mxu0
    %v320 = vadd.f32 %v170, %v319
    %v321 = vpop.f32.mrb[0].mxu0
    %v322 = vpop.f32.mrb[0].mxu0
    %v323 = vpop.f32.mrb[0].mxu0
    %324 = vdwg.mxu0
    %v325 = vxor.u32 %v320, 2147483648
    %v326 = vmul.f32 %v325, 1.442695
    %v327 = vpow.pop %v326
    %v328 = vadd.f32 %v327, 1.0
    %v329 = vrcp.pop %v328
    %v330 = vmul.f32 1.0, %v329
    %vm331 = vcmp.gt.f32.partialorder %v330, %v186
    %v332 = vld [vmem:[#allocation13] sm:$0xff]
    %v333 = vld [vmem:[#allocation13 + $0x8] sm:$0xff]
    %v334 = vsel %vm331, 1, 0
    %v335 = vcvt.s32.f32 %v334
    %v336 = vpack.c.bf16 %v335, %v335
    %v353 = vunpack.c.l.b16 %v117
    %v354 = vunpack.c.h.b16 %v117
    %v355 = vunpack.c.l.b16 %v118
    %v356 = vunpack.c.h.b16 %v118
    %v357 = vunpack.c.l.b16 %v119
    %v358 = vunpack.c.h.b16 %v119
    %v359 = vunpack.c.l.b16 %v120
    %v360 = vunpack.c.h.b16 %v120
    %v361 = vunpack.c.l.b16 %v121
    %v362 = vunpack.c.h.b16 %v121
    %v363 = vunpack.c.l.b16 %v122
    %v364 = vunpack.c.h.b16 %v122
    %v365 = vunpack.c.l.b16 %v123
    %v366 = vunpack.c.h.b16 %v123
    %v367 = vunpack.c.l.b16 %v124
    %v368 = vunpack.c.h.b16 %v124
    %v369 = vunpack.c.l.b16 %v125
    %v370 = vunpack.c.h.b16 %v125
    %v371 = vunpack.c.l.b16 %v126
    %v372 = vunpack.c.h.b16 %v126
    %v373 = vunpack.c.l.b16 %v127
    %v374 = vunpack.c.h.b16 %v127
    %v375 = vunpack.c.l.b16 %v128
    %v376 = vunpack.c.h.b16 %v128
    %v377 = vunpack.c.l.b16 %v129
    %v378 = vunpack.c.h.b16 %v129
    %v379 = vunpack.c.l.b16 %v130
    %v380 = vunpack.c.h.b16 %v130
    %v381 = vunpack.c.l.b16 %v131
    %v382 = vunpack.c.h.b16 %v131
    %v383 = vunpack.c.l.b16 %v132
    %v384 = vunpack.c.h.b16 %v132
    %v385 = vpack.c.b16 %v355, %v353
    %v386 = vpack.c.b16 %v356, %v354
    %v387 = vpack.c.b16 %v359, %v357
    %v388 = vpack.c.b16 %v360, %v358
    %v389 = vpack.c.b16 %v363, %v361
    %v390 = vpack.c.b16 %v364, %v362
    %v391 = vpack.c.b16 %v367, %v365
    %v392 = vpack.c.b16 %v368, %v366
    %v393 = vpack.c.b16 %v371, %v369
    %v394 = vpack.c.b16 %v372, %v370
    %v395 = vpack.c.b16 %v375, %v373
    %v396 = vpack.c.b16 %v376, %v374
    %v397 = vpack.c.b16 %v379, %v377
    %v398 = vpack.c.b16 %v380, %v378
    %v399 = vpack.c.b16 %v383, %v381
    %v400 = vpack.c.b16 %v384, %v382
    %417 = vmatprep.subr.bf16.mxu0 %v386
    %418 = vmatpush1.bf16.msra.mxu0 %v385
    %419 = vmatprep.subr.bf16.mxu0 %v388
    %420 = vmatpush1.bf16.msra.mxu0 %v387
    %421 = vmatprep.subr.bf16.mxu0 %v390
    %422 = vmatpush1.bf16.msra.mxu0 %v389
    %423 = vmatprep.subr.bf16.mxu0 %v392
    %424 = vmatpush1.bf16.msra.mxu0 %v391
    %425 = vmatprep.subr.bf16.mxu0 %v394
    %426 = vmatpush1.bf16.msra.mxu0 %v393
    %427 = vmatprep.subr.bf16.mxu0 %v396
    %428 = vmatpush1.bf16.msra.mxu0 %v395
    %429 = vmatprep.subr.bf16.mxu0 %v398
    %430 = vmatpush1.bf16.msra.mxu0 %v397
    %431 = vmatprep.subr.bf16.mxu0 %v400
    %432 = vmatpush1.bf16.msra.mxu0 %v399
    %433 = vmatprep.subr.bf16.mxu0 0
    %434 = vmatpush1.bf16.msra.mxu0 0
    %435 = vmatprep.subr.bf16.mxu0 0
    %436 = vmatpush1.bf16.msra.mxu0 0
    %437 = vmatprep.subr.bf16.mxu0 0
    %438 = vmatpush1.bf16.msra.mxu0 0
    %439 = vmatprep.subr.bf16.mxu0 0
    %440 = vmatpush1.bf16.msra.mxu0 0
    %441 = vmatprep.subr.bf16.mxu0 0
    %442 = vmatpush1.bf16.msra.mxu0 0
    %443 = vmatprep.subr.bf16.mxu0 0
    %444 = vmatpush1.bf16.msra.mxu0 0
    %445 = vmatprep.subr.bf16.mxu0 0
    %446 = vmatpush1.bf16.msra.mxu0 0
    %447 = vmatprep.subr.bf16.mxu0 0
    %448 = vmatpush1.bf16.msra.mxu0 0
    %449 = vmatprep.mubr.bf16.mxu0 0
    %450 = vmatmul.mubr.bf16.gmra.mrb[0].mxu0 %v336
    %v451 = vpop.f32.mrb[0].mxu0
    %v452 = vadd.f32 %v177, %v451
    %v453 = vpop.f32.mrb[0].mxu0
    %v454 = vadd.f32 %v181, %v453
    %v455 = vpop.f32.mrb[0].mxu0
    %v456 = vpop.f32.mrb[0].mxu0
    %457 = vdwg.mxu0
    %v458 = vxor.u32 %v452, 2147483648
    %v459 = vxor.u32 %v454, 2147483648
    %v460 = vmul.f32 %v458, 1.442695
    %v461 = vpow.pop %v460
    %v462 = vmul.f32 %v459, 1.442695
    %v463 = vpow.pop %v462
    %v464 = vadd.f32 %v461, 1.0
    %v465 = vadd.f32 %v463, 1.0
    %v466 = vrcp.pop %v464
    %v467 = vmul.f32 1.0, %v466
    %v468 = vrcp.pop %v465
    %v469 = vmul.f32 1.0, %v468
    %vm470 = vcmp.gt.f32.partialorder %v467, %v332
    %vm471 = vcmp.gt.f32.partialorder %v469, %v333
    %s472 = scalar_lea.vmem [#allocation11], 8
    %v473 = vld [vmem:[%s472] sm:$0xff]
    %v474 = vsel %vm470, 1, 0
    %v475 = vsel %vm471, 1, 0
    %v476 = vcvt.s32.f32 %v474
    %v477 = vcvt.s32.f32 %v475
    %v478 = vpack.c.bf16 %v476, %v476
    %v479 = vpack.c.bf16 %v477, %v477
    %480 = vmatprep.subr.bf16.mxu0 0
    %481 = vmatpush1.bf16.msra.mxu0 %v253
    %482 = vmatprep.subr.bf16.mxu0 0
    %483 = vmatpush1.bf16.msra.mxu0 %v254
    %484 = vmatprep.subr.bf16.mxu0 0
    %485 = vmatpush1.bf16.msra.mxu0 %v255
    %486 = vmatprep.subr.bf16.mxu0 0
    %487 = vmatpush1.bf16.msra.mxu0 %v256
    %488 = vmatprep.subr.bf16.mxu0 0
    %489 = vmatpush1.bf16.msra.mxu0 %v257
    %490 = vmatprep.subr.bf16.mxu0 0
    %491 = vmatpush1.bf16.msra.mxu0 %v258
    %492 = vmatprep.subr.bf16.mxu0 0
    %493 = vmatpush1.bf16.msra.mxu0 %v259
    %494 = vmatprep.subr.bf16.mxu0 0
    %495 = vmatpush1.bf16.msra.mxu0 %v260
    %496 = vmatprep.subr.bf16.mxu0 0
    %497 = vmatpush1.bf16.msra.mxu0 %v261
    %498 = vmatprep.subr.bf16.mxu0 0
    %499 = vmatpush1.bf16.msra.mxu0 %v262
    %500 = vmatprep.subr.bf16.mxu0 0
    %501 = vmatpush1.bf16.msra.mxu0 %v263
    %502 = vmatprep.subr.bf16.mxu0 0
    %503 = vmatpush1.bf16.msra.mxu0 %v264
    %504 = vmatprep.subr.bf16.mxu0 0
    %505 = vmatpush1.bf16.msra.mxu0 %v265
    %506 = vmatprep.subr.bf16.mxu0 0
    %507 = vmatpush1.bf16.msra.mxu0 %v266
    %508 = vmatprep.subr.bf16.mxu0 0
    %509 = vmatpush1.bf16.msra.mxu0 %v267
    %510 = vmatprep.subr.bf16.mxu0 0
    %511 = vmatpush1.bf16.msra.mxu0 %v268
    %512 = vmatprep.mubr.bf16.mxu0 %v479
    %513 = vmatmul.mubr.bf16.gmra.mrb[0].mxu0 %v478
    %v514 = vpop.f32.mrb[0].mxu0
    %v515 = vadd.f32 %v170, %v514
    %v516 = vpop.f32.mrb[0].mxu0
    %v517 = vpop.f32.mrb[0].mxu0
    %v518 = vpop.f32.mrb[0].mxu0
    %519 = vdwg.mxu0
    %v520 = vxor.u32 %v515, 2147483648
    %v521 = vmul.f32 %v520, 1.442695
    %v522 = vpow.pop %v521
    %v523 = vadd.f32 %v522, 1.0
    %v524 = vrcp.pop %v523
    %v525 = vmul.f32 1.0, %v524
    %vm526 = vcmp.gt.f32.partialorder %v525, %v473
    %s527 = scalar_lea.vmem [#allocation13], 16
    %v528 = vld [vmem:[%s527] sm:$0xff]
    %v529 = vld [vmem:[%s527 + $0x8] sm:$0xff]
    %v530 = vsel %vm526, 1, 0
    %v531 = vcvt.s32.f32 %v530
    %v532 = vpack.c.bf16 %v531, %v531
    %533 = vmatprep.subr.bf16.mxu0 %v386
    %534 = vmatpush1.bf16.msra.mxu0 %v385
    %535 = vmatprep.subr.bf16.mxu0 %v388
    %536 = vmatpush1.bf16.msra.mxu0 %v387
    %537 = vmatprep.subr.bf16.mxu0 %v390
    %538 = vmatpush1.bf16.msra.mxu0 %v389
    %539 = vmatprep.subr.bf16.mxu0 %v392
    %540 = vmatpush1.bf16.msra.mxu0 %v391
    %541 = vmatprep.subr.bf16.mxu0 %v394
    %542 = vmatpush1.bf16.msra.mxu0 %v393
    %543 = vmatprep.subr.bf16.mxu0 %v396
    %544 = vmatpush1.bf16.msra.mxu0 %v395
    %545 = vmatprep.subr.bf16.mxu0 %v398
    %546 = vmatpush1.bf16.msra.mxu0 %v397
    %547 = vmatprep.subr.bf16.mxu0 %v400
    %548 = vmatpush1.bf16.msra.mxu0 %v399
    %549 = vmatprep.subr.bf16.mxu0 0
    %550 = vmatpush1.bf16.msra.mxu0 0
    %551 = vmatprep.subr.bf16.mxu0 0
    %552 = vmatpush1.bf16.msra.mxu0 0
    %553 = vmatprep.subr.bf16.mxu0 0
    %554 = vmatpush1.bf16.msra.mxu0 0
    %555 = vmatprep.subr.bf16.mxu0 0
    %556 = vmatpush1.bf16.msra.mxu0 0
    %557 = vmatprep.subr.bf16.mxu0 0
    %558 = vmatpush1.bf16.msra.mxu0 0
    %559 = vmatprep.subr.bf16.mxu0 0
    %560 = vmatpush1.bf16.msra.mxu0 0
    %561 = vmatprep.subr.bf16.mxu0 0
    %562 = vmatpush1.bf16.msra.mxu0 0
    %563 = vmatprep.subr.bf16.mxu0 0
    %564 = vmatpush1.bf16.msra.mxu0 0
    %565 = vmatprep.mubr.bf16.mxu0 0
    %566 = vmatmul.mubr.bf16.gmra.mrb[0].mxu0 %v532
    %v567 = vpop.f32.mrb[0].mxu0
    %v568 = vadd.f32 %v177, %v567
    %v569 = vpop.f32.mrb[0].mxu0
    %v570 = vadd.f32 %v181, %v569
    %v571 = vpop.f32.mrb[0].mxu0
    %v572 = vpop.f32.mrb[0].mxu0
    %573 = vdwg.mxu0
    %v574 = vxor.u32 %v568, 2147483648
    %v575 = vxor.u32 %v570, 2147483648
    %v576 = vmul.f32 %v574, 1.442695
    %v577 = vpow.pop %v576
    %v578 = vmul.f32 %v575, 1.442695
    %v579 = vpow.pop %v578
    %v580 = vadd.f32 %v577, 1.0
    %v581 = vadd.f32 %v579, 1.0
    %v582 = vrcp.pop %v580
    %v583 = vmul.f32 1.0, %v582
    %v584 = vrcp.pop %v581
    %v585 = vmul.f32 1.0, %v584
    %vm586 = vcmp.gt.f32.partialorder %v583, %v528
    %vm587 = vcmp.gt.f32.partialorder %v585, %v529
    %s588 = scalar_lea.vmem [#allocation11], 16
    %v589 = vld [vmem:[%s588] sm:$0xff]
    %v590 = vsel %vm586, 1, 0
    %v591 = vsel %vm587, 1, 0
    %v592 = vcvt.s32.f32 %v590
    %v593 = vcvt.s32.f32 %v591
    %v594 = vpack.c.bf16 %v592, %v592
    %v595 = vpack.c.bf16 %v593, %v593
    %596 = vmatprep.subr.bf16.mxu0 0
    %597 = vmatpush1.bf16.msra.mxu0 %v253
    %598 = vmatprep.subr.bf16.mxu0 0
    %599 = vmatpush1.bf16.msra.mxu0 %v254
    %600 = vmatprep.subr.bf16.mxu0 0
    %601 = vmatpush1.bf16.msra.mxu0 %v255
    %602 = vmatprep.subr.bf16.mxu0 0
    %603 = vmatpush1.bf16.msra.mxu0 %v256
    %604 = vmatprep.subr.bf16.mxu0 0
    %605 = vmatpush1.bf16.msra.mxu0 %v257
    %606 = vmatprep.subr.bf16.mxu0 0
    %607 = vmatpush1.bf16.msra.mxu0 %v258
    %608 = vmatprep.subr.bf16.mxu0 0
    %609 = vmatpush1.bf16.msra.mxu0 %v259
    %610 = vmatprep.subr.bf16.mxu0 0
    %611 = vmatpush1.bf16.msra.mxu0 %v260
    %612 = vmatprep.subr.bf16.mxu0 0
    %613 = vmatpush1.bf16.msra.mxu0 %v261
    %614 = vmatprep.subr.bf16.mxu0 0
    %615 = vmatpush1.bf16.msra.mxu0 %v262
    %616 = vmatprep.subr.bf16.mxu0 0
    %617 = vmatpush1.bf16.msra.mxu0 %v263
    %618 = vmatprep.subr.bf16.mxu0 0
    %619 = vmatpush1.bf16.msra.mxu0 %v264
    %620 = vmatprep.subr.bf16.mxu0 0
    %621 = vmatpush1.bf16.msra.mxu0 %v265
    %622 = vmatprep.subr.bf16.mxu0 0
    %623 = vmatpush1.bf16.msra.mxu0 %v266
    %624 = vmatprep.subr.bf16.mxu0 0
    %625 = vmatpush1.bf16.msra.mxu0 %v267
    %626 = vmatprep.subr.bf16.mxu0 0
    %627 = vmatpush1.bf16.msra.mxu0 %v268
    %628 = vmatprep.mubr.bf16.mxu0 %v595
    %629 = vmatmul.mubr.bf16.gmra.mrb[0].mxu0 %v594
    %v630 = vpop.f32.mrb[0].mxu0
    %v631 = vadd.f32 %v170, %v630
    %v632 = vpop.f32.mrb[0].mxu0
    %v633 = vpop.f32.mrb[0].mxu0
    %v634 = vpop.f32.mrb[0].mxu0
    %635 = vdwg.mxu0
    %v636 = vxor.u32 %v631, 2147483648
    %v637 = vmul.f32 %v636, 1.442695
    %v638 = vpow.pop %v637
    %v639 = vadd.f32 %v638, 1.0
    %v640 = vrcp.pop %v639
    %v641 = vmul.f32 1.0, %v640
    %vm642 = vcmp.gt.f32.partialorder %v641, %v589
    %s643 = scalar_lea.vmem [#allocation13], 32
    %v644 = vld [vmem:[%s643] sm:$0xff]
    %v645 = vld [vmem:[%s643 + $0x8] sm:$0xff]
    %v646 = vsel %vm642, 1, 0
    %v647 = vcvt.s32.f32 %v646
    %v648 = vpack.c.bf16 %v647, %v647
    %649 = vmatprep.subr.bf16.mxu0 %v386
    %650 = vmatpush1.bf16.msra.mxu0 %v385
    %651 = vmatprep.subr.bf16.mxu0 %v388
    %652 = vmatpush1.bf16.msra.mxu0 %v387
    %653 = vmatprep.subr.bf16.mxu0 %v390
    %654 = vmatpush1.bf16.msra.mxu0 %v389
    %655 = vmatprep.subr.bf16.mxu0 %v392
    %656 = vmatpush1.bf16.msra.mxu0 %v391
    %657 = vmatprep.subr.bf16.mxu0 %v394
    %658 = vmatpush1.bf16.msra.mxu0 %v393
    %659 = vmatprep.subr.bf16.mxu0 %v396
    %660 = vmatpush1.bf16.msra.mxu0 %v395
    %661 = vmatprep.subr.bf16.mxu0 %v398
    %662 = vmatpush1.bf16.msra.mxu0 %v397
    %663 = vmatprep.subr.bf16.mxu0 %v400
    %664 = vmatpush1.bf16.msra.mxu0 %v399
    %665 = vmatprep.subr.bf16.mxu0 0
    %666 = vmatpush1.bf16.msra.mxu0 0
    %667 = vmatprep.subr.bf16.mxu0 0
    %668 = vmatpush1.bf16.msra.mxu0 0
    %669 = vmatprep.subr.bf16.mxu0 0
    %670 = vmatpush1.bf16.msra.mxu0 0
    %671 = vmatprep.subr.bf16.mxu0 0
    %672 = vmatpush1.bf16.msra.mxu0 0
    %673 = vmatprep.subr.bf16.mxu0 0
    %674 = vmatpush1.bf16.msra.mxu0 0
    %675 = vmatprep.subr.bf16.mxu0 0
    %676 = vmatpush1.bf16.msra.mxu0 0
    %677 = vmatprep.subr.bf16.mxu0 0
    %678 = vmatpush1.bf16.msra.mxu0 0
    %679 = vmatprep.subr.bf16.mxu0 0
    %680 = vmatpush1.bf16.msra.mxu0 0
    %681 = vmatprep.mubr.bf16.mxu0 0
    %682 = vmatmul.mubr.bf16.gmra.mrb[0].mxu0 %v648
    %v683 = vpop.f32.mrb[0].mxu0
    %v684 = vadd.f32 %v177, %v683
    %v685 = vpop.f32.mrb[0].mxu0
    %v686 = vadd.f32 %v181, %v685
    %v687 = vpop.f32.mrb[0].mxu0
    %v688 = vpop.f32.mrb[0].mxu0
    %689 = vdwg.mxu0
    %v690 = vxor.u32 %v684, 2147483648
    %v691 = vxor.u32 %v686, 2147483648
    %v692 = vmul.f32 %v690, 1.442695
    %v693 = vpow.pop %v692
    %v694 = vmul.f32 %v691, 1.442695
    %v695 = vpow.pop %v694
    %v696 = vadd.f32 %v693, 1.0
    %v697 = vadd.f32 %v695, 1.0
    %v698 = vrcp.pop %v696
    %v699 = vmul.f32 1.0, %v698
    %v700 = vrcp.pop %v697
    %v701 = vmul.f32 1.0, %v700
    %vm702 = vcmp.gt.f32.partialorder %v699, %v644
    %vm703 = vcmp.gt.f32.partialorder %v701, %v645
    %v704 = vsel %vm702, 1, 0
    %v705 = vsel %vm703, 1, 0
    %v706 = vcvt.s32.f32 %v704
    %v707 = vcvt.s32.f32 %v705
    %708 = vst [vmem:[#allocation14] sm:$0xff] %v706
    %709 = vst [vmem:[#allocation14 + $0x8] sm:$0xff] %v707
    // Predicated region
    $region58: #{tpu_custom_call.1} parent=1 // pred_check
      _
    $region59: #{tpu_custom_call.1} parent=1 // pred_check_branch
      %711 = sbr.rel (0) target = $region61
    $region60: #{tpu_custom_call.1} parent=1 // pred_region
      %s713 = ssub.s32 256, 256
      %714 = vsyncadd [#allocation4], %s713
      %s716 = sshll.u32 [#allocation14], 4
      %s717 = int_to_ptr.vmem [resolvable:$true] %s716
      %719 = dma.vmem_to_hbm [thread:$0]  %s717, 256, %s7, [#allocation4]
    $region61: #{tpu_custom_call.1} parent=1 // pred_fallthru
      _
    // Predicated region
    $region62: #{tpu_custom_call.1} parent=1 // pred_check
      _
    $region63: #{tpu_custom_call.1} parent=1 // pred_check_branch
      %721 = sbr.rel (0) target = $region65
    $region64: #{tpu_custom_call.1} parent=1 // pred_region
      %722 = dma.done [#allocation4], 256
    $region65: #{tpu_custom_call.1} parent=1 // pred_fallthru
      _
    %723 = vsyncpa [#allocation3], 1
    %724 = vsyncpa [#allocation6], 1
    %725 = vsyncpa [#allocation9], 1
    %726 = vsyncpa [#allocation12], 1
    %727 = vsyncpa [#allocation4], 1

</llo_original>
